<compile_context>
chip_gen: v7x
topology: tpu7x:2x2x1
jax: 0.10.0
libtpu: 0.0.40
codegen_flags: <defaults>
</compile_context>

<pallas_src>
import jax
import jax.numpy as jnp
from jax.experimental import pallas as pl
from jax.experimental.pallas import tpu as pltpu


def _round_up(x, m):
    return -(-x // m) * m


def _cdiv(a, b):
    return -(-a // b)


# ----------------------------- kernel ----------------------------------------


def _make_fused_mlp_kernel(acts, use_mxu):
    """Build the fused kernel body for a fixed layer structure.

    acts:    per-layer activation name ('relu' | 'tanh' | None).
    use_mxu: per-layer bool.  False => dout==1 layer done as VPU multiply +
             lane reduction (weight stored pre-transposed as (1, din)).
    Kernel args: (x_ref, w0, b0, w1, b1, ..., o_ref); BN/bias already folded.
    """
    num_layers = len(acts)

    def kernel(x_ref, *refs):
        o_ref = refs[-1]
        p = refs[:-1]
        h = x_ref[...].astype(jnp.float32)
        for li in range(num_layers):
            w_ref = p[2 * li]
            b = p[2 * li + 1][...]                      # f32 (1, dout)
            if use_mxu[li]:
                # bf16 (or f32) operands, f32 accumulate on the MXU.
                h = jnp.dot(h.astype(w_ref.dtype), w_ref[...],
                            preferred_element_type=jnp.float32) + b
            else:
                # dout == 1: skip the N=1 MXU push/pop; VPU mul + XLU reduce.
                w = w_ref[...].astype(jnp.float32)      # (1, din), lane-dense
                h = jnp.sum(h * w, axis=-1, keepdims=True) + b
            a = acts[li]
            if a == "relu":
                h = jnp.maximum(h, 0.0)
            elif a == "tanh":
                h = jnp.tanh(h)
        o_ref[...] = h.astype(o_ref.dtype)

    return kernel


# ----------------------------- wrapper ----------------------------------------


def fused_mlp(x, layers, acts, *, bm=512, use_bf16=True):
    """Run the fused MLP.

    layers: list of (W, b) with W: (d_in, d_out) f32, b: (1, d_out) f32
            (BatchNorm already folded in, f32).
    acts:   matching list of 'relu' | 'tanh' | None.
    bm:     max batch tile (rows per grid step).
    """
    n, d_in0 = x.shape
    d_out_final = layers[-1][0].shape[1]
    out_dtype = x.dtype

    # --- batch tiling: minimal padding, >= 2 grid steps for v7x dual-TC ------
    row_mult = max(8, 32 // x.dtype.itemsize)   # f32 -> 8, bf16 -> 16 sublanes
    num_tiles = max(_cdiv(n, bm), 2)
    bm_eff = _round_up(_cdiv(n, num_tiles), row_mult)
    n_pad = _round_up(n, bm_eff)
    if n_pad != n:
        x = jnp.pad(x, ((0, n_pad - n), (0, 0)))
    grid = (n_pad // bm_eff,)

    in_specs = [pl.BlockSpec((bm_eff, d_in0), lambda i: (i, 0))]
    flat_params = []
    use_mxu = []
    flops = 0
    transcendentals = 0
    bytes_accessed = (x.size * x.dtype.itemsize
                      + n_pad * d_out_final * out_dtype.itemsize)
    weight_vmem = 0
    max_width = d_in0
    for (w, b), a in zip(layers, acts):
        din, dout = w.shape
        max_width = max(max_width, dout)
        mxu = dout > 1
        use_mxu.append(mxu)
        if mxu:
            w_stored = w.astype(jnp.bfloat16) if use_bf16 else w.astype(jnp.float32)
        else:
            # store the (din, 1) projection column lane-dense as a (1, din) row
            w_stored = w.T.astype(jnp.float32)
        b_stored = b.astype(jnp.float32)
        # Weights/biases are grid-constant: broadcast index_map + single buffer.
        in_specs.append(pl.BlockSpec(w_stored.shape, lambda i: (0, 0),
                                     pipeline_mode=pl.Buffered(1)))
        in_specs.append(pl.BlockSpec(b_stored.shape, lambda i: (0, 0),
                                     pipeline_mode=pl.Buffered(1)))
        flat_params += [w_stored, b_stored]
        flops += 2 * n_pad * din * dout
        if a == "tanh":
            transcendentals += n_pad * dout
        nbytes = (w_stored.size * w_stored.dtype.itemsize
                  + b_stored.size * b_stored.dtype.itemsize)
        bytes_accessed += nbytes
        weight_vmem += nbytes

    # VMEM budget: double-buffered in/out blocks + single-buffered weights +
    # activation scratch, with headroom; capped under v7x's 64 MiB physical.
    act_scratch = bm_eff * max_width * (4 + 2) * 2
    vmem_bytes = (2 * bm_eff * d_in0 * x.dtype.itemsize
                  + 2 * bm_eff * d_out_final * out_dtype.itemsize
                  + weight_vmem + act_scratch)
    vmem_limit = int(min(max(2 * vmem_bytes + (8 << 20), 32 << 20), 60 << 20))

    kernel = _make_fused_mlp_kernel(tuple(acts), tuple(use_mxu))
    out = pl.pallas_call(
        kernel,
        out_shape=jax.ShapeDtypeStruct((n_pad, d_out_final), out_dtype),
        grid=grid,
        in_specs=in_specs,
        out_specs=pl.BlockSpec((bm_eff, d_out_final), lambda i: (i, 0)),
        compiler_params=pltpu.CompilerParams(
            dimension_semantics=("parallel",),
            vmem_limit_bytes=vmem_limit),
        cost_estimate=pl.CostEstimate(
            flops=flops,
            transcendentals=transcendentals,
            bytes_accessed=bytes_accessed),
    )(x, *flat_params)
    return out[:n] if n_pad != n else out


def fold_bn_into_linear(params, *, act="relu", eps=1e-5):
    """Fold eval-mode BatchNorm into the preceding linear layer (exact, in f32)."""
    layers, acts = [], []
    for (w, b, gamma, beta, mean, var) in params["hidden"]:
        scale = gamma * jax.lax.rsqrt(var + eps)        # (1, d_out)
        layers.append((w * scale, (b - mean) * scale + beta))
        acts.append(act)
    if params["out"] is not None:
        layers.append(params["out"])
        acts.append(None)
    return layers, acts


def mlp_forward(params, x, *, act="relu", bm=512, use_bf16=True):
    # TODO(synk): torch.nn.Dropout is identity in eval mode; no kernel work needed.
    layers, acts = fold_bn_into_linear(params, act=act)
    return fused_mlp(x, layers, acts, bm=bm, use_bf16=use_bf16)


# ----------------------------- params ----------------------------------------


def init_mlp_params(key, input_dim, hidden_dims, output_layer=True):
    params = {"hidden": [], "out": None}
    d_in = input_dim
    for h in hidden_dims:
        key, kw, kb = jax.random.split(key, 3)
        bound = 1.0 / jnp.sqrt(d_in)
        w = jax.random.uniform(kw, (d_in, h), jnp.float32, -bound, bound)
        b = jax.random.uniform(kb, (1, h), jnp.float32, -bound, bound)
        gamma = jnp.ones((1, h), jnp.float32)          # torch BN default weight
        beta = jnp.zeros((1, h), jnp.float32)          # torch BN default bias
        mean = jnp.zeros((1, h), jnp.float32)          # running_mean init
        var = jnp.ones((1, h), jnp.float32)            # running_var init
        params["hidden"].append((w, b, gamma, beta, mean, var))
        d_in = h
    if output_layer:
        key, kw, kb = jax.random.split(key, 3)
        bound = 1.0 / jnp.sqrt(d_in)
        w = jax.random.uniform(kw, (d_in, 1), jnp.float32, -bound, bound)
        b = jax.random.uniform(kb, (1, 1), jnp.float32, -bound, bound)
        params["out"] = (w, b)
    return params


# ----------------------------- main ------------------------------------------

if __name__ == "__main__":
    key = jax.random.PRNGKey(0)
    batch, input_dim = 8, 16
    hidden_dims = [32, 32]
    dropout = 0.5  # identity in eval mode

    key, kx, kp = jax.random.split(key, 3)
    x = jax.random.normal(kx, (batch, input_dim), jnp.float32)
    params = init_mlp_params(kp, input_dim, hidden_dims, output_layer=True)

    # plain-JAX eval-mode reference (un-folded BN math, f32)
    def ref_forward(params, x, act):
        h = x
        for (w, b, gamma, beta, mean, var) in params["hidden"]:
            h = h @ w + b
            h = (h - mean) * jax.lax.rsqrt(var + 1e-5) * gamma + beta
            h = jnp.maximum(h, 0.0) if act == "relu" else jnp.tanh(h)
        w, b = params["out"]
        return h @ w + b

    ok = True
    for act in ("relu", "tanh"):
        ref = ref_forward(params, x, act)
        # exact f32 path (structure / BN-fold correctness)
        out_f32 = mlp_forward(params, x, act=act, use_bf16=False)
        jax.block_until_ready(out_f32)
        ok = ok and out_f32.shape == (batch, 1)
        ok = ok and bool(jnp.allclose(out_f32, ref, atol=1e-5, rtol=1e-5))
        # bf16-MXU fast path (looser tolerance vs. f32 torch reference)
        out_bf16 = mlp_forward(params, x, act=act, use_bf16=True)
        jax.block_until_ready(out_bf16)
        ok = ok and out_bf16.shape == (batch, 1)
        ok = ok and bool(jnp.allclose(out_bf16, ref, atol=5e-2, rtol=5e-2))

    # batch not a multiple of the tile: exercises minimal-padding + 2-step grid
    x_odd = jax.random.normal(key, (13, input_dim), jnp.float32)
    ref_odd = ref_forward(params, x_odd, "relu")
    out_odd = mlp_forward(params, x_odd, act="relu")
    jax.block_until_ready(out_odd)
    ok = ok and out_odd.shape == (13, 1)
    ok = ok and bool(jnp.allclose(out_odd, ref_odd, atol=5e-2, rtol=5e-2))

    assert ok
    print("KERNEL_OK")
</pallas_src>

<mosaic_0001>
module attributes {stable_mosaic.version = 11 : i64} {
  func.func @kernel(%arg0: i32, %arg1: memref<8x16xf32, #tpu.memory_space<vmem>>, %arg2: memref<16x32xf32, #tpu.memory_space<vmem>>, %arg3: memref<1x32xf32, #tpu.memory_space<vmem>>, %arg4: memref<32x32xf32, #tpu.memory_space<vmem>>, %arg5: memref<1x32xf32, #tpu.memory_space<vmem>>, %arg6: memref<1x32xf32, #tpu.memory_space<vmem>>, %arg7: memref<1x1xf32, #tpu.memory_space<vmem>>, %arg8: memref<8x1xf32, #tpu.memory_space<vmem>>) attributes {dimension_semantics = [#tpu.dimension_semantics<parallel>], iteration_bounds = array<i64: 1>, scalar_prefetch = 0 : i64, scratch_operands = 0 : i64, tpu.core_type = #tpu.core_type<tc>, window_params = [{transform_indices = @transform_0, window_bounds = array<i64: 8, 16>}, {pipeline_mode = #tpu.pipeline_mode<synchronous>, transform_indices = @transform_1, window_bounds = array<i64: 16, 32>}, {pipeline_mode = #tpu.pipeline_mode<synchronous>, transform_indices = @transform_2, window_bounds = array<i64: 1, 32>}, {pipeline_mode = #tpu.pipeline_mode<synchronous>, transform_indices = @transform_3, window_bounds = array<i64: 32, 32>}, {pipeline_mode = #tpu.pipeline_mode<synchronous>, transform_indices = @transform_4, window_bounds = array<i64: 1, 32>}, {pipeline_mode = #tpu.pipeline_mode<synchronous>, transform_indices = @transform_5, window_bounds = array<i64: 1, 32>}, {pipeline_mode = #tpu.pipeline_mode<synchronous>, transform_indices = @transform_6, window_bounds = array<i64: 1, 1>}, {transform_indices = @transform_7, window_bounds = array<i64: 8, 1>}]} {
    %c0 = arith.constant 0 : index
    %c0_0 = arith.constant 0 : index
    %0 = vector.load %arg1[%c0, %c0_0] : memref<8x16xf32, #tpu.memory_space<vmem>>, vector<8x16xf32>
    %c0_1 = arith.constant 0 : index
    %c0_2 = arith.constant 0 : index
    %1 = vector.load %arg3[%c0_1, %c0_2] : memref<1x32xf32, #tpu.memory_space<vmem>>, vector<1x32xf32>
    %c0_3 = arith.constant 0 : index
    %c0_4 = arith.constant 0 : index
    %2 = vector.load %arg2[%c0_3, %c0_4] : memref<16x32xf32, #tpu.memory_space<vmem>>, vector<16x32xf32>
    %cst = arith.constant dense<0.000000e+00> : vector<8x32xf32>
    %3 = tpu.matmul %0, %2, %cst {dimension_numbers = #tpu.dot_dimension_numbers<[1], [0], [0], [1], [0, 0, 1, 1], [], []>} : vector<8x16xf32>, vector<16x32xf32>, vector<8x32xf32> -> vector<8x32xf32>
    %4 = vector.broadcast %1 : vector<1x32xf32> to vector<8x32xf32>
    %5 = arith.addf %3, %4 : vector<8x32xf32>
    %cst_5 = arith.constant 0.000000e+00 : f32
    %6 = vector.broadcast %cst_5 : f32 to vector<8x32xf32>
    %7 = arith.maximumf %5, %6 : vector<8x32xf32>
    %c0_6 = arith.constant 0 : index
    %c0_7 = arith.constant 0 : index
    %8 = vector.load %arg5[%c0_6, %c0_7] : memref<1x32xf32, #tpu.memory_space<vmem>>, vector<1x32xf32>
    %c0_8 = arith.constant 0 : index
    %c0_9 = arith.constant 0 : index
    %9 = vector.load %arg4[%c0_8, %c0_9] : memref<32x32xf32, #tpu.memory_space<vmem>>, vector<32x32xf32>
    %cst_10 = arith.constant dense<0.000000e+00> : vector<8x32xf32>
    %10 = tpu.matmul %7, %9, %cst_10 {dimension_numbers = #tpu.dot_dimension_numbers<[1], [0], [0], [1], [0, 0, 1, 1], [], []>} : vector<8x32xf32>, vector<32x32xf32>, vector<8x32xf32> -> vector<8x32xf32>
    %11 = vector.broadcast %8 : vector<1x32xf32> to vector<8x32xf32>
    %12 = arith.addf %10, %11 : vector<8x32xf32>
    %cst_11 = arith.constant 0.000000e+00 : f32
    %13 = vector.broadcast %cst_11 : f32 to vector<8x32xf32>
    %14 = arith.maximumf %12, %13 : vector<8x32xf32>
    %c0_12 = arith.constant 0 : index
    %c0_13 = arith.constant 0 : index
    %15 = vector.load %arg7[%c0_12, %c0_13] : memref<1x1xf32, #tpu.memory_space<vmem>>, vector<1x1xf32>
    %c0_14 = arith.constant 0 : index
    %c0_15 = arith.constant 0 : index
    %16 = vector.load %arg6[%c0_14, %c0_15] : memref<1x32xf32, #tpu.memory_space<vmem>>, vector<1x32xf32>
    %17 = vector.broadcast %16 : vector<1x32xf32> to vector<8x32xf32>
    %18 = arith.mulf %14, %17 : vector<8x32xf32>
    %cst_16 = arith.constant dense<0.000000e+00> : vector<8xf32>
    %19 = vector.multi_reduction <add>, %18, %cst_16 [1] : vector<8x32xf32> to vector<8xf32>
    %20 = vector.shape_cast %19 : vector<8xf32> to vector<8x1xf32>
    %21 = vector.broadcast %15 : vector<1x1xf32> to vector<8x1xf32>
    %22 = arith.addf %20, %21 : vector<8x1xf32>
    %c0_17 = arith.constant 0 : index
    %c0_18 = arith.constant 0 : index
    %23 = vector.load %arg8[%c0_17, %c0_18] : memref<8x1xf32, #tpu.memory_space<vmem>>, vector<8x1xf32>
    tpu.vector_store %arg8[%c0_17, %c0_18], %22 {strides = array<i32>} : memref<8x1xf32, #tpu.memory_space<vmem>>, vector<8x1xf32>,
    return
  }
  func.func @transform_0(%arg0: i32) -> (i32, i32) {
    %c0_i32 = arith.constant 0 : i32
    %c0_i32_0 = arith.constant 0 : i32
    return %arg0, %c0_i32 : i32, i32
  }
  func.func @transform_1(%arg0: i32) -> (i32, i32) {
    %c0_i32 = arith.constant 0 : i32
    %c0_i32_0 = arith.constant 0 : i32
    %c0_i32_1 = arith.constant 0 : i32
    return %c0_i32, %c0_i32_0 : i32, i32
  }
  func.func @transform_2(%arg0: i32) -> (i32, i32) {
    %c0_i32 = arith.constant 0 : i32
    %c0_i32_0 = arith.constant 0 : i32
    %c0_i32_1 = arith.constant 0 : i32
    return %c0_i32, %c0_i32_0 : i32, i32
  }
  func.func @transform_3(%arg0: i32) -> (i32, i32) {
    %c0_i32 = arith.constant 0 : i32
    %c0_i32_0 = arith.constant 0 : i32
    %c0_i32_1 = arith.constant 0 : i32
    return %c0_i32, %c0_i32_0 : i32, i32
  }
  func.func @transform_4(%arg0: i32) -> (i32, i32) {
    %c0_i32 = arith.constant 0 : i32
    %c0_i32_0 = arith.constant 0 : i32
    %c0_i32_1 = arith.constant 0 : i32
    return %c0_i32, %c0_i32_0 : i32, i32
  }
  func.func @transform_5(%arg0: i32) -> (i32, i32) {
    %c0_i32 = arith.constant 0 : i32
    %c0_i32_0 = arith.constant 0 : i32
    %c0_i32_1 = arith.constant 0 : i32
    return %c0_i32, %c0_i32_0 : i32, i32
  }
  func.func @transform_6(%arg0: i32) -> (i32, i32) {
    %c0_i32 = arith.constant 0 : i32
    %c0_i32_0 = arith.constant 0 : i32
    %c0_i32_1 = arith.constant 0 : i32
    return %c0_i32, %c0_i32_0 : i32, i32
  }
  func.func @transform_7(%arg0: i32) -> (i32, i32) {
    %c0_i32 = arith.constant 0 : i32
    %c0_i32_0 = arith.constant 0 : i32
    return %arg0, %c0_i32 : i32, i32
  }
}

</mosaic_0001>

<llo_original>
// kernel: tpu_custom_call.1
$region0: #{tpu_custom_call.1}
  #allocation0 [shape = 'u32[]', space=smem, size = 0x4, offset = 0x4, fixed_abs, tag = 'smem constant byte address 0x4 - core index']
  #allocation1 [shape = 'u32[144,128]{1,0:T(1,128)}', space=vmem, size = 0x12000, scoped, tag = 'internal scratch']
  #allocation2 [shape = 'f32[1,1]{1,0:T(1,128)S(1)}', space=vmem, size = 0x200, scoped, tag = 'scoped memory for tpu_custom_call.1']
  %s0 = inlined_call_operand.hbm [shape: f32[8,16], index: 0, kind: input, shape index: {}]
  %s1 = inlined_call_operand.hbm [shape: f32[16,32], index: 1, kind: input, shape index: {}]
  %s2 = inlined_call_operand.vmem [shape: f32[1,32], index: 2, kind: input, shape index: {}]
  %s3 = inlined_call_operand.hbm [shape: f32[32,32], index: 3, kind: input, shape index: {}]
  %s4 = inlined_call_operand.vmem [shape: f32[1,32], index: 4, kind: input, shape index: {}]
  %s5 = inlined_call_operand.vmem [shape: f32[1,32], index: 5, kind: input, shape index: {}]
  %s6 = inlined_call_operand.<no memory space> [shape: f32[1,1], index: 6, kind: input, shape index: {}]
  %s7 = inlined_call_operand.vmem [shape: f32[8,1], index: 7, kind: output, shape index: {}]
  %s8 = sld [smem:[#allocation0]]
  $region50: #{tpu_custom_call.1} parent=0
    _
  %s10 = ssub.s32 1, %s8
  %s11 = scalar_select 0, %s10, %s8
  %v12 = vstv %s6
  %13 = vst [vmem:[#allocation2] sm:$0x1] %v12
  $region1: #{tpu_custom_call.1} parent=0
    #allocation3 [shape = 'u8[4096]{0}', space=vmem, size = 0x1000, scoped, tag = 'input window, operand 0, single buffered']
    #allocation4 [shape = 's32[1]{0}', space=sflag, size = 0x4, scoped, tag = 'scoped memory for tpu_custom_call.1']
    #allocation5 [shape = 'u8[8192]{0}', space=vmem, size = 0x2000, scoped, tag = 'input window, operand 1, single buffered']
    #allocation6 [shape = 's32[1]{0}', space=sflag, size = 0x4, scoped, tag = 'scoped memory for tpu_custom_call.1']
    #allocation7 [shape = 'u8[16384]{0}', space=vmem, size = 0x4000, scoped, tag = 'input window, operand 3, single buffered']
    %14 = vsyncpa [#allocation4], 0
    %15 = vsyncpa [#allocation6], 0
    // Predicated region
    $region2: #{tpu_custom_call.1} parent=1 // pred_check
      _
    $region3: #{tpu_custom_call.1} parent=1 // pred_check_branch
      %17 = sbr.rel (0) target = $region5
    $region4: #{tpu_custom_call.1} parent=1 // pred_region
      %s19 = ssub.s32 128, 128
      %20 = vsyncadd [#allocation4], %s19
      %s22 = sshll.u32 [#allocation3], 4
      %s23 = int_to_ptr.vmem [resolvable:$true] %s22
      %25 = dma.hbm_to_vmem [thread:$0]  %s0, 128, %s23, [#allocation4]
    $region5: #{tpu_custom_call.1} parent=1 // pred_fallthru
      _
    // Predicated region
    $region6: #{tpu_custom_call.1} parent=1 // pred_check
      _
    $region7: #{tpu_custom_call.1} parent=1 // pred_check_branch
      %27 = sbr.rel (0) target = $region9
    $region8: #{tpu_custom_call.1} parent=1 // pred_region
      %s29 = ssub.s32 256, 256
      %30 = vsyncadd [#allocation6], %s29
      %s31 = sshll.u32 [#allocation5], 4
      %s32 = int_to_ptr.vmem [resolvable:$true] %s31
      %37 = dma.hbm_to_vmem [thread:$0]  %s1, 256, %s32, [#allocation6], 128, 128, 8
    $region9: #{tpu_custom_call.1} parent=1 // pred_fallthru
      _
    // Predicated region
    $region10: #{tpu_custom_call.1} parent=1 // pred_check
      _
    $region11: #{tpu_custom_call.1} parent=1 // pred_check_branch
      %39 = sbr.rel (0) target = $region13
    $region12: #{tpu_custom_call.1} parent=1 // pred_region
      _
    $region13: #{tpu_custom_call.1} parent=1 // pred_fallthru
      _
    // Predicated region
    $region14: #{tpu_custom_call.1} parent=1 // pred_check
      _
    $region15: #{tpu_custom_call.1} parent=1 // pred_check_branch
      %41 = sbr.rel (0) target = $region17
    $region16: #{tpu_custom_call.1} parent=1 // pred_region
      %s43 = ssub.s32 512, 512
      %44 = vsyncadd [#allocation6], %s43
      %s45 = sshll.u32 [#allocation7], 4
      %s46 = int_to_ptr.vmem [resolvable:$true] %s45
      %51 = dma.hbm_to_vmem [thread:$0]  %s3, 512, %s46, [#allocation6], 128, 128, 8
    $region17: #{tpu_custom_call.1} parent=1 // pred_fallthru
      _
    // Predicated region
    $region18: #{tpu_custom_call.1} parent=1 // pred_check
      _
    $region19: #{tpu_custom_call.1} parent=1 // pred_check_branch
      %53 = sbr.rel (0) target = $region21
    $region20: #{tpu_custom_call.1} parent=1 // pred_region
      _
    $region21: #{tpu_custom_call.1} parent=1 // pred_fallthru
      _
    // Predicated region
    $region22: #{tpu_custom_call.1} parent=1 // pred_check
      _
    $region23: #{tpu_custom_call.1} parent=1 // pred_check_branch
      %55 = sbr.rel (0) target = $region25
    $region24: #{tpu_custom_call.1} parent=1 // pred_region
      _
    $region25: #{tpu_custom_call.1} parent=1 // pred_fallthru
      _
    // Predicated region
    $region26: #{tpu_custom_call.1} parent=1 // pred_check
      _
    $region27: #{tpu_custom_call.1} parent=1 // pred_check_branch
      %57 = sbr.rel (0) target = $region29
    $region28: #{tpu_custom_call.1} parent=1 // pred_region
      _
    $region29: #{tpu_custom_call.1} parent=1 // pred_fallthru
      _
    // Predicated region
    $region30: #{tpu_custom_call.1} parent=1 // pred_check
      _
    $region31: #{tpu_custom_call.1} parent=1 // pred_check_branch
      %59 = sbr.rel (0) target = $region33
    $region32: #{tpu_custom_call.1} parent=1 // pred_region
      %60 = dma.done [#allocation4], 128
    $region33: #{tpu_custom_call.1} parent=1 // pred_fallthru
      _
    // Predicated region
    $region34: #{tpu_custom_call.1} parent=1 // pred_check
      _
    $region35: #{tpu_custom_call.1} parent=1 // pred_check_branch
      %62 = sbr.rel (0) target = $region37
    $region36: #{tpu_custom_call.1} parent=1 // pred_region
      %63 = dma.done [#allocation6], 256
    $region37: #{tpu_custom_call.1} parent=1 // pred_fallthru
      _
    // Predicated region
    $region38: #{tpu_custom_call.1} parent=1 // pred_check
      _
    $region39: #{tpu_custom_call.1} parent=1 // pred_check_branch
      %65 = sbr.rel (0) target = $region41
    $region40: #{tpu_custom_call.1} parent=1 // pred_region
      %66 = dma.done [#allocation6], 512
    $region41: #{tpu_custom_call.1} parent=1 // pred_fallthru
      _
    %v67 = vld [vmem:[#allocation3] sm:$0xff]
    %v68 = vld [vmem:[%s2] sm:$0x1]
    %v69 = vld [vmem:[#allocation5] sm:$0xff]
    %v70 = vld [vmem:[#allocation5 + $0x8] sm:$0xff]
    %v72 = vlaneseq
    %v73 = vshrl.u32 %v72, 7
    %v74 = vsub.s32 0, %v73
    %v75 = vrot.slane %v68, %v74
    %vm77 = vcmask 130048
    %v79 = vsel %vm77, %v67, 0
    %81 = vmatprep.subr.mxu0 0.0
    %82 = vmatpush1.msra.mxu0 %v69
    %83 = vmatprep.subr.mxu0 0.0
    %84 = vmatpush1.msra.mxu0 %v70
    %85 = vmatprep.subr.mxu0 0.0
    %86 = vmatpush1.msra.mxu0 0.0
    %87 = vmatprep.subr.mxu0 0.0
    %88 = vmatpush1.msra.mxu0 0.0
    %89 = vmatprep.subr.mxu0 0.0
    %90 = vmatpush1.msra.mxu0 0.0
    %91 = vmatprep.subr.mxu0 0.0
    %92 = vmatpush1.msra.mxu0 0.0
    %93 = vmatprep.subr.mxu0 0.0
    %94 = vmatpush1.msra.mxu0 0.0
    %95 = vmatprep.subr.mxu0 0.0
    %96 = vmatpush1.msra.mxu0 0.0
    %97 = vmatprep.subr.mxu0 0.0
    %98 = vmatpush1.msra.mxu0 0.0
    %99 = vmatprep.subr.mxu0 0.0
    %100 = vmatpush1.msra.mxu0 0.0
    %101 = vmatprep.subr.mxu0 0.0
    %102 = vmatpush1.msra.mxu0 0.0
    %103 = vmatprep.subr.mxu0 0.0
    %104 = vmatpush1.msra.mxu0 0.0
    %105 = vmatprep.subr.mxu0 0.0
    %106 = vmatpush1.msra.mxu0 0.0
    %107 = vmatprep.subr.mxu0 0.0
    %108 = vmatpush1.msra.mxu0 0.0
    %109 = vmatprep.subr.mxu0 0.0
    %110 = vmatpush1.msra.mxu0 0.0
    %111 = vmatprep.subr.mxu0 0.0
    %112 = vmatpush1.msra.mxu0 0.0
    %113 = vmatprep.subr.mxu0 0.0
    %114 = vmatpush1.msra.mxu0 0.0
    %115 = vmatprep.subr.mxu0 0.0
    %116 = vmatpush1.msra.mxu0 0.0
    %117 = vmatprep.subr.mxu0 0.0
    %118 = vmatpush1.msra.mxu0 0.0
    %119 = vmatprep.subr.mxu0 0.0
    %120 = vmatpush1.msra.mxu0 0.0
    %121 = vmatprep.subr.mxu0 0.0
    %122 = vmatpush1.msra.mxu0 0.0
    %123 = vmatprep.subr.mxu0 0.0
    %124 = vmatpush1.msra.mxu0 0.0
    %125 = vmatprep.subr.mxu0 0.0
    %126 = vmatpush1.msra.mxu0 0.0
    %127 = vmatprep.subr.mxu0 0.0
    %128 = vmatpush1.msra.mxu0 0.0
    %129 = vmatprep.subr.mxu0 0.0
    %130 = vmatpush1.msra.mxu0 0.0
    %131 = vmatprep.subr.mxu0 0.0
    %132 = vmatpush1.msra.mxu0 0.0
    %133 = vmatprep.subr.mxu0 0.0
    %134 = vmatpush1.msra.mxu0 0.0
    %135 = vmatprep.subr.mxu0 0.0
    %136 = vmatpush1.msra.mxu0 0.0
    %137 = vmatprep.subr.mxu0 0.0
    %138 = vmatpush1.msra.mxu0 0.0
    %139 = vmatprep.subr.mxu0 0.0
    %140 = vmatpush1.msra.mxu0 0.0
    %141 = vmatprep.subr.mxu0 0.0
    %142 = vmatpush1.msra.mxu0 0.0
    %143 = vmatprep.subr.mxu0 0.0
    %144 = vmatpush1.msra.mxu0 0.0
    %145 = vmatprep.mubr.f32.mxu0 0.0
    %146 = vmatmul.mubr.f32.gmra.mrb[0].mxu0 %v79
    %v147 = vpop.f32.mrb[0].mxu0
    %v148 = vadd.f32 %v75, %v147
    %v149 = vpop.f32.mrb[0].mxu0
    %150 = vdwg.mxu0
    %v151 = vmax.f32 %v148, 0.0
    %v152 = vld [vmem:[%s4] sm:$0x1]
    %v153 = vld [vmem:[#allocation7] sm:$0xff]
    %v154 = vld [vmem:[#allocation7 + $0x8] sm:$0xff]
    %v155 = vld [vmem:[#allocation7 + $0x10] sm:$0xff]
    %v156 = vld [vmem:[#allocation7 + $0x18] sm:$0xff]
    %v158 = vlaneseq
    %v159 = vshrl.u32 %v158, 7
    %v160 = vsub.s32 0, %v159
    %v161 = vrot.slane %v152, %v160
    %vm163 = vcmask 261120
    %v165 = vsel %vm163, %v151, 0
    %167 = vmatprep.subr.mxu0 0.0
    %168 = vmatpush1.msra.mxu0 %v153
    %169 = vmatprep.subr.mxu0 0.0
    %170 = vmatpush1.msra.mxu0 %v154
    %171 = vmatprep.subr.mxu0 0.0
    %172 = vmatpush1.msra.mxu0 %v155
    %173 = vmatprep.subr.mxu0 0.0
    %174 = vmatpush1.msra.mxu0 %v156
    %175 = vmatprep.subr.mxu0 0.0
    %176 = vmatpush1.msra.mxu0 0.0
    %177 = vmatprep.subr.mxu0 0.0
    %178 = vmatpush1.msra.mxu0 0.0
    %179 = vmatprep.subr.mxu0 0.0
    %180 = vmatpush1.msra.mxu0 0.0
    %181 = vmatprep.subr.mxu0 0.0
    %182 = vmatpush1.msra.mxu0 0.0
    %183 = vmatprep.subr.mxu0 0.0
    %184 = vmatpush1.msra.mxu0 0.0
    %185 = vmatprep.subr.mxu0 0.0
    %186 = vmatpush1.msra.mxu0 0.0
    %187 = vmatprep.subr.mxu0 0.0
    %188 = vmatpush1.msra.mxu0 0.0
    %189 = vmatprep.subr.mxu0 0.0
    %190 = vmatpush1.msra.mxu0 0.0
    %191 = vmatprep.subr.mxu0 0.0
    %192 = vmatpush1.msra.mxu0 0.0
    %193 = vmatprep.subr.mxu0 0.0
    %194 = vmatpush1.msra.mxu0 0.0
    %195 = vmatprep.subr.mxu0 0.0
    %196 = vmatpush1.msra.mxu0 0.0
    %197 = vmatprep.subr.mxu0 0.0
    %198 = vmatpush1.msra.mxu0 0.0
    %199 = vmatprep.subr.mxu0 0.0
    %200 = vmatpush1.msra.mxu0 0.0
    %201 = vmatprep.subr.mxu0 0.0
    %202 = vmatpush1.msra.mxu0 0.0
    %203 = vmatprep.subr.mxu0 0.0
    %204 = vmatpush1.msra.mxu0 0.0
    %205 = vmatprep.subr.mxu0 0.0
    %206 = vmatpush1.msra.mxu0 0.0
    %207 = vmatprep.subr.mxu0 0.0
    %208 = vmatpush1.msra.mxu0 0.0
    %209 = vmatprep.subr.mxu0 0.0
    %210 = vmatpush1.msra.mxu0 0.0
    %211 = vmatprep.subr.mxu0 0.0
    %212 = vmatpush1.msra.mxu0 0.0
    %213 = vmatprep.subr.mxu0 0.0
    %214 = vmatpush1.msra.mxu0 0.0
    %215 = vmatprep.subr.mxu0 0.0
    %216 = vmatpush1.msra.mxu0 0.0
    %217 = vmatprep.subr.mxu0 0.0
    %218 = vmatpush1.msra.mxu0 0.0
    %219 = vmatprep.subr.mxu0 0.0
    %220 = vmatpush1.msra.mxu0 0.0
    %221 = vmatprep.subr.mxu0 0.0
    %222 = vmatpush1.msra.mxu0 0.0
    %223 = vmatprep.subr.mxu0 0.0
    %224 = vmatpush1.msra.mxu0 0.0
    %225 = vmatprep.subr.mxu0 0.0
    %226 = vmatpush1.msra.mxu0 0.0
    %227 = vmatprep.subr.mxu0 0.0
    %228 = vmatpush1.msra.mxu0 0.0
    %229 = vmatprep.subr.mxu0 0.0
    %230 = vmatpush1.msra.mxu0 0.0
    %231 = vmatprep.mubr.f32.mxu0 0.0
    %232 = vmatmul.mubr.f32.gmra.mrb[0].mxu0 %v165
    %v233 = vpop.f32.mrb[0].mxu0
    %v234 = vadd.f32 %v161, %v233
    %v235 = vpop.f32.mrb[0].mxu0
    %236 = vdwg.mxu0
    %v237 = vmax.f32 %v234, 0.0
    %v238 = vld [vmem:[#allocation2] sm:$0x1]
    %v239 = vld [vmem:[%s5] sm:$0x1]
    %v241 = vlaneseq
    %v242 = vshrl.u32 %v241, 7
    %v243 = vsub.s32 0, %v242
    %v244 = vrot.slane %v239, %v243
    %v246 = vmul.f32 %v237, %v244
    %v247 = vsel %vm163, %v246, 0.0
    %248 = vadd.xlane.f32.xlu0 %v247
    %v249 = vpop.xlane.xlu0 %248
    %v251 = vlaneseq
    %v252 = vshrl.u32 %v251, 7
    %v253 = vsub.s32 0, %v252
    %v254 = vrot.slane %v238, %v253
    %v256 = vadd.f32 %v249, %v254
    %vm257 = vcmask 7168
    %258 = vst.msk [vmem:[%s7] sm:$0xff] %vm257, %v256
    // Predicated region
    $region42: #{tpu_custom_call.1} parent=1 // pred_check
      _
    $region43: #{tpu_custom_call.1} parent=1 // pred_check_branch
      %260 = sbr.rel (0) target = $region45
    $region44: #{tpu_custom_call.1} parent=1 // pred_region
      _
    $region45: #{tpu_custom_call.1} parent=1 // pred_fallthru
      _
    // Predicated region
    $region46: #{tpu_custom_call.1} parent=1 // pred_check
      _
    $region47: #{tpu_custom_call.1} parent=1 // pred_check_branch
      %262 = sbr.rel (0) target = $region49
    $region48: #{tpu_custom_call.1} parent=1 // pred_region
      _
    $region49: #{tpu_custom_call.1} parent=1 // pred_fallthru
      _
    %263 = vsyncpa [#allocation4], 1
    %264 = vsyncpa [#allocation6], 1

</llo_original>
